<compile_context>
chip_gen: v7x
topology: tpu7x:2x2x1
jax: 0.10.0
libtpu: 0.0.40
codegen_flags: <defaults>
</compile_context>

<pallas_src>
import jax
import jax.numpy as jnp
from jax.experimental import pallas as pl
from jax.experimental.pallas import tpu as pltpu

_LANE = 128
# 8192 rows x 128 lanes x 4 B = 4 MiB per f32 block.
# 2 inputs + 2 outputs, double-buffered => 32 MiB VMEM footprint.
_TILE_ROWS = 8192
# Use a single full-array block only for truly tiny inputs.
_SINGLE_BLOCK_ROWS = 256
# For mid-size tensors, pick a tile that yields at least this many grid steps.
_MIN_GRID_STEPS = 4


def _center_radius_relu_kernel(c_ref, r_ref, c_out_ref, r_out_ref):
    c = c_ref[...]
    r = r_ref[...]
    lower_relu = jnp.maximum(c - r, 0.0)
    upper_relu = jnp.maximum(c + r, 0.0)
    c_out_ref[...] = (lower_relu + upper_relu) * 0.5
    r_out_ref[...] = (upper_relu - lower_relu) * 0.5


def _interval_relu_jax(center, radius):
    """Plain-JAX fallback (reference math) for tiny tails."""
    lower_relu = jnp.maximum(center - radius, 0.0)
    upper_relu = jnp.maximum(center + radius, 0.0)
    return (lower_relu + upper_relu) * 0.5, (upper_relu - lower_relu) * 0.5


def _run_kernel_2d(c2d, r2d):
    """Run the Pallas kernel on a lane-dense (rows, 128) slab."""
    rows = c2d.shape[0]
    dtype = c2d.dtype

    if rows <= _SINGLE_BLOCK_ROWS:
        # Tiny input: one full-array block, grid of 1.
        tile_rows = rows
        grid = (1,)
    else:
        # Ensure >= _MIN_GRID_STEPS grid steps so DMA-in / compute / DMA-out
        # overlap; cap at the 4 MiB block sweet spot. Keep sublane-aligned.
        target = pl.cdiv(rows, _MIN_GRID_STEPS)
        target = ((target + 7) // 8) * 8
        tile_rows = max(8, min(_TILE_ROWS, target))
        grid = (pl.cdiv(rows, tile_rows),)  # ragged last tile handled by Pallas

    spec = pl.BlockSpec((tile_rows, _LANE), lambda i: (i, 0))

    total = rows * _LANE
    itemsize = jnp.dtype(dtype).itemsize
    cost = pl.CostEstimate(
        flops=8 * total,              # 2 add, 2 sub, 2 max, 2 mul per element
        transcendentals=0,
        bytes_accessed=4 * total * itemsize,  # 2 reads + 2 writes
    )

    return pl.pallas_call(
        _center_radius_relu_kernel,
        out_shape=(
            jax.ShapeDtypeStruct((rows, _LANE), dtype),
            jax.ShapeDtypeStruct((rows, _LANE), dtype),
        ),
        grid_spec=pltpu.PrefetchScalarGridSpec(
            num_scalar_prefetch=0,
            grid=grid,
            in_specs=[spec, spec],
            out_specs=[spec, spec],
        ),
        compiler_params=pltpu.CompilerParams(
            dimension_semantics=("parallel",),
            # 32 MiB of double-buffered refs + internal scratch; safe on
            # v5e/v6e (128 MiB VMEM) and v7x (64 MiB/TC).
            vmem_limit_bytes=48 << 20,
        ),
        cost_estimate=cost,
    )(c2d, r2d)


def center_radius_relu(center: jax.Array, radius: jax.Array):
    """Applies interval-ReLU to a CenterRadius pair. Returns (center_out, radius_out).

    Assumes radius >= 0 (same implicit assumption as the PyTorch module).
    """
    assert center.shape == radius.shape and center.dtype == radius.dtype
    orig_shape = center.shape
    total = center.size

    if total == 0:
        return center, radius

    c_flat = jnp.reshape(center, (-1,))
    r_flat = jnp.reshape(radius, (-1,))

    aligned = (total // _LANE) * _LANE
    tail = total - aligned

    if tail == 0:
        # Common case: no padding, no post-slice, no extra HBM copies.
        rows = total // _LANE
        c2d, r2d = _run_kernel_2d(
            c_flat.reshape(rows, _LANE), r_flat.reshape(rows, _LANE)
        )
        return c2d.reshape(orig_shape), r2d.reshape(orig_shape)

    if aligned == 0:
        # Less than one lane row: a kernel launch is not worth it.
        c_out, r_out = _interval_relu_jax(c_flat, r_flat)
        return c_out.reshape(orig_shape), r_out.reshape(orig_shape)

    # Non-multiple-of-128: kernel on the 128-aligned prefix, <128-element tail
    # in plain JAX (avoids full-tensor pad + post-slice HBM round trips).
    rows = aligned // _LANE
    c_main, r_main = _run_kernel_2d(
        c_flat[:aligned].reshape(rows, _LANE),
        r_flat[:aligned].reshape(rows, _LANE),
    )
    c_tail, r_tail = _interval_relu_jax(c_flat[aligned:], r_flat[aligned:])
    c_out = jnp.concatenate([c_main.reshape(-1), c_tail]).reshape(orig_shape)
    r_out = jnp.concatenate([r_main.reshape(-1), r_tail]).reshape(orig_shape)
    return c_out, r_out


if __name__ == "__main__":
    key = jax.random.PRNGKey(0)
    k_c, k_r = jax.random.split(key)
    # NCHW: batch=2, channels=4, spatial=16x16
    center = jax.random.normal(k_c, (2, 4, 16, 16), dtype=jnp.float32)
    radius = jnp.abs(jax.random.normal(k_r, (2, 4, 16, 16), dtype=jnp.float32))

    c_out, r_out = center_radius_relu(center, radius)
    jax.block_until_ready((c_out, r_out))

    # Reference check in plain JAX.
    lower = center - radius
    upper = center + radius
    lr = jnp.maximum(lower, 0.0)
    ur = jnp.maximum(upper, 0.0)
    c_ref = (lr + ur) / 2
    r_ref = (ur - lr) / 2
    assert c_out.shape == center.shape and r_out.shape == radius.shape
    assert jnp.allclose(c_out, c_ref, atol=1e-6)
    assert jnp.allclose(r_out, r_ref, atol=1e-6)

    print("KERNEL_OK")
</pallas_src>

<mosaic_0001>
module attributes {stable_mosaic.version = 11 : i64} {
  func.func @_center_radius_relu_kernel(%arg0: i32, %arg1: memref<16x128xf32, #tpu.memory_space<vmem>>, %arg2: memref<16x128xf32, #tpu.memory_space<vmem>>, %arg3: memref<16x128xf32, #tpu.memory_space<vmem>>, %arg4: memref<16x128xf32, #tpu.memory_space<vmem>>) attributes {dimension_semantics = [#tpu.dimension_semantics<parallel>], iteration_bounds = array<i64: 1>, scalar_prefetch = 0 : i64, scratch_operands = 0 : i64, tpu.core_type = #tpu.core_type<tc>, window_params = [{transform_indices = @transform_0, window_bounds = array<i64: 16, 128>}, {transform_indices = @transform_1, window_bounds = array<i64: 16, 128>}, {transform_indices = @transform_2, window_bounds = array<i64: 16, 128>}, {transform_indices = @transform_3, window_bounds = array<i64: 16, 128>}]} {
    %c0 = arith.constant 0 : index
    %c0_0 = arith.constant 0 : index
    %0 = vector.load %arg1[%c0, %c0_0] : memref<16x128xf32, #tpu.memory_space<vmem>>, vector<16x128xf32>
    %c0_1 = arith.constant 0 : index
    %c0_2 = arith.constant 0 : index
    %1 = vector.load %arg2[%c0_1, %c0_2] : memref<16x128xf32, #tpu.memory_space<vmem>>, vector<16x128xf32>
    %2 = arith.subf %0, %1 : vector<16x128xf32>
    %cst = arith.constant 0.000000e+00 : f32
    %3 = vector.broadcast %cst : f32 to vector<16x128xf32>
    %4 = arith.maximumf %2, %3 : vector<16x128xf32>
    %5 = arith.addf %0, %1 : vector<16x128xf32>
    %cst_3 = arith.constant 0.000000e+00 : f32
    %6 = vector.broadcast %cst_3 : f32 to vector<16x128xf32>
    %7 = arith.maximumf %5, %6 : vector<16x128xf32>
    %8 = arith.addf %4, %7 : vector<16x128xf32>
    %cst_4 = arith.constant 5.000000e-01 : f32
    %9 = vector.broadcast %cst_4 : f32 to vector<16x128xf32>
    %10 = arith.mulf %8, %9 : vector<16x128xf32>
    %c0_5 = arith.constant 0 : index
    %c0_6 = arith.constant 0 : index
    %11 = vector.load %arg3[%c0_5, %c0_6] : memref<16x128xf32, #tpu.memory_space<vmem>>, vector<16x128xf32>
    tpu.vector_store %arg3[%c0_5, %c0_6], %10 {strides = array<i32>} : memref<16x128xf32, #tpu.memory_space<vmem>>, vector<16x128xf32>,
    %12 = arith.subf %7, %4 : vector<16x128xf32>
    %cst_7 = arith.constant 5.000000e-01 : f32
    %13 = vector.broadcast %cst_7 : f32 to vector<16x128xf32>
    %14 = arith.mulf %12, %13 : vector<16x128xf32>
    %c0_8 = arith.constant 0 : index
    %c0_9 = arith.constant 0 : index
    %15 = vector.load %arg4[%c0_8, %c0_9] : memref<16x128xf32, #tpu.memory_space<vmem>>, vector<16x128xf32>
    tpu.vector_store %arg4[%c0_8, %c0_9], %14 {strides = array<i32>} : memref<16x128xf32, #tpu.memory_space<vmem>>, vector<16x128xf32>,
    return
  }
  func.func @transform_0(%arg0: i32) -> (i32, i32) {
    %c0_i32 = arith.constant 0 : i32
    %c0_i32_0 = arith.constant 0 : i32
    return %arg0, %c0_i32 : i32, i32
  }
  func.func @transform_1(%arg0: i32) -> (i32, i32) {
    %c0_i32 = arith.constant 0 : i32
    %c0_i32_0 = arith.constant 0 : i32
    return %arg0, %c0_i32 : i32, i32
  }
  func.func @transform_2(%arg0: i32) -> (i32, i32) {
    %c0_i32 = arith.constant 0 : i32
    %c0_i32_0 = arith.constant 0 : i32
    return %arg0, %c0_i32 : i32, i32
  }
  func.func @transform_3(%arg0: i32) -> (i32, i32) {
    %c0_i32 = arith.constant 0 : i32
    %c0_i32_0 = arith.constant 0 : i32
    return %arg0, %c0_i32 : i32, i32
  }
}

</mosaic_0001>

<llo_original>
// kernel: tpu_custom_call.1
$region0: #{tpu_custom_call.1}
  #allocation0 [shape = 'u32[]', space=smem, size = 0x4, offset = 0x4, fixed_abs, tag = 'smem constant byte address 0x4 - core index']
  #allocation1 [shape = 'u32[144,128]{1,0:T(1,128)}', space=vmem, size = 0x12000, scoped, tag = 'internal scratch']
  %s0 = inlined_call_operand.hbm [shape: f32[16,128], index: 0, kind: input, shape index: {}]
  %s1 = inlined_call_operand.hbm [shape: f32[16,128], index: 1, kind: input, shape index: {}]
  %s2 = inlined_call_operand.hbm [shape: f32[16,128], index: 2, kind: output, shape index: {0}]
  %s3 = inlined_call_operand.hbm [shape: f32[16,128], index: 3, kind: output, shape index: {1}]
  %4 = xla_tuple %s2, %s3
  %s5 = sld [smem:[#allocation0]]
  $region34: #{tpu_custom_call.1} parent=0
    _
  %s7 = ssub.s32 1, %s5
  %s8 = scalar_select 0, %s7, %s5
  $region1: #{tpu_custom_call.1} parent=0
    #allocation2 [shape = 'u8[8192]{0}', space=vmem, size = 0x2000, scoped, tag = 'input window, operand 0, single buffered']
    #allocation3 [shape = 's32[1]{0}', space=sflag, size = 0x4, scoped, tag = 'scoped memory for tpu_custom_call.1']
    #allocation4 [shape = 's32[1]{0}', space=sflag, size = 0x4, scoped, tag = 'scoped memory for tpu_custom_call.1']
    #allocation5 [shape = 'u8[8192]{0}', space=vmem, size = 0x2000, scoped, tag = 'input window, operand 1, single buffered']
    #allocation6 [shape = 's32[1]{0}', space=sflag, size = 0x4, scoped, tag = 'scoped memory for tpu_custom_call.1']
    #allocation7 [shape = 'u8[8192]{0}', space=vmem, size = 0x2000, scoped, tag = 'output window, operand 0, single buffered']
    #allocation8 [shape = 'u8[8192]{0}', space=vmem, size = 0x2000, scoped, tag = 'output window, operand 1, single buffered']
    #allocation9 [shape = 's32[1]{0}', space=sflag, size = 0x4, scoped, tag = 'scoped memory for tpu_custom_call.1']
    %9 = vsyncpa [#allocation3], 0
    %10 = vsyncpa [#allocation6], 0
    %11 = vsyncpa [#allocation4], 0
    %12 = vsyncpa [#allocation9], 0
    // Predicated region
    $region2: #{tpu_custom_call.1} parent=1 // pred_check
      _
    $region3: #{tpu_custom_call.1} parent=1 // pred_check_branch
      %14 = sbr.rel (0) target = $region5
    $region4: #{tpu_custom_call.1} parent=1 // pred_region
      %s16 = ssub.s32 256, 256
      %17 = vsyncadd [#allocation3], %s16
      %s18 = sshll.u32 [#allocation2], 4
      %s19 = int_to_ptr.vmem [resolvable:$true] %s18
      %24 = dma.hbm_to_vmem [thread:$0]  %s0, 256, %s19, [#allocation3], 128, 128, 8
    $region5: #{tpu_custom_call.1} parent=1 // pred_fallthru
      _
    // Predicated region
    $region6: #{tpu_custom_call.1} parent=1 // pred_check
      _
    $region7: #{tpu_custom_call.1} parent=1 // pred_check_branch
      %26 = sbr.rel (0) target = $region9
    $region8: #{tpu_custom_call.1} parent=1 // pred_region
      %s28 = ssub.s32 256, 256
      %29 = vsyncadd [#allocation6], %s28
      %s30 = sshll.u32 [#allocation5], 4
      %s31 = int_to_ptr.vmem [resolvable:$true] %s30
      %36 = dma.hbm_to_vmem [thread:$0]  %s1, 256, %s31, [#allocation6], 128, 128, 8
    $region9: #{tpu_custom_call.1} parent=1 // pred_fallthru
      _
    // Predicated region
    $region10: #{tpu_custom_call.1} parent=1 // pred_check
      _
    $region11: #{tpu_custom_call.1} parent=1 // pred_check_branch
      %38 = sbr.rel (0) target = $region13
    $region12: #{tpu_custom_call.1} parent=1 // pred_region
      %39 = dma.done [#allocation3], 256
    $region13: #{tpu_custom_call.1} parent=1 // pred_fallthru
      _
    // Predicated region
    $region14: #{tpu_custom_call.1} parent=1 // pred_check
      _
    $region15: #{tpu_custom_call.1} parent=1 // pred_check_branch
      %41 = sbr.rel (0) target = $region17
    $region16: #{tpu_custom_call.1} parent=1 // pred_region
      %42 = dma.done [#allocation6], 256
    $region17: #{tpu_custom_call.1} parent=1 // pred_fallthru
      _
    %v43 = vld [vmem:[#allocation2] sm:$0xff]
    %v44 = vld [vmem:[#allocation2 + $0x8] sm:$0xff]
    %v45 = vld [vmem:[#allocation5] sm:$0xff]
    %v46 = vld [vmem:[#allocation5 + $0x8] sm:$0xff]
    %v47 = vsub.f32 %v43, %v45
    %v48 = vsub.f32 %v44, %v46
    %v49 = vmax.f32 %v47, 0.0
    %v50 = vmax.f32 %v48, 0.0
    %v51 = vadd.f32 %v43, %v45
    %v52 = vadd.f32 %v44, %v46
    %v53 = vmax.f32 %v51, 0.0
    %v54 = vmax.f32 %v52, 0.0
    %v55 = vadd.f32 %v49, %v53
    %v56 = vadd.f32 %v50, %v54
    %v57 = vmul.f32 %v55, 0.5
    %v58 = vmul.f32 %v56, 0.5
    %59 = vst [vmem:[#allocation7] sm:$0xff] %v57
    %60 = vst [vmem:[#allocation7 + $0x8] sm:$0xff] %v58
    %v61 = vsub.f32 %v53, %v49
    %v62 = vsub.f32 %v54, %v50
    %v63 = vmul.f32 %v61, 0.5
    %v64 = vmul.f32 %v62, 0.5
    %65 = vst [vmem:[#allocation8] sm:$0xff] %v63
    %66 = vst [vmem:[#allocation8 + $0x8] sm:$0xff] %v64
    // Predicated region
    $region18: #{tpu_custom_call.1} parent=1 // pred_check
      _
    $region19: #{tpu_custom_call.1} parent=1 // pred_check_branch
      %68 = sbr.rel (0) target = $region21
    $region20: #{tpu_custom_call.1} parent=1 // pred_region
      %s70 = ssub.s32 256, 256
      %71 = vsyncadd [#allocation4], %s70
      %s72 = sshll.u32 [#allocation7], 4
      %s73 = int_to_ptr.vmem [resolvable:$true] %s72
      %78 = dma.vmem_to_hbm [thread:$0]  %s73, 256, %s2, [#allocation4], 128, 128, 8
    $region21: #{tpu_custom_call.1} parent=1 // pred_fallthru
      _
    // Predicated region
    $region22: #{tpu_custom_call.1} parent=1 // pred_check
      _
    $region23: #{tpu_custom_call.1} parent=1 // pred_check_branch
      %80 = sbr.rel (0) target = $region25
    $region24: #{tpu_custom_call.1} parent=1 // pred_region
      %s82 = ssub.s32 256, 256
      %83 = vsyncadd [#allocation9], %s82
      %s84 = sshll.u32 [#allocation8], 4
      %s85 = int_to_ptr.vmem [resolvable:$true] %s84
      %90 = dma.vmem_to_hbm [thread:$0]  %s85, 256, %s3, [#allocation9], 128, 128, 8
    $region25: #{tpu_custom_call.1} parent=1 // pred_fallthru
      _
    // Predicated region
    $region26: #{tpu_custom_call.1} parent=1 // pred_check
      _
    $region27: #{tpu_custom_call.1} parent=1 // pred_check_branch
      %92 = sbr.rel (0) target = $region29
    $region28: #{tpu_custom_call.1} parent=1 // pred_region
      %93 = dma.done [#allocation4], 256
    $region29: #{tpu_custom_call.1} parent=1 // pred_fallthru
      _
    // Predicated region
    $region30: #{tpu_custom_call.1} parent=1 // pred_check
      _
    $region31: #{tpu_custom_call.1} parent=1 // pred_check_branch
      %95 = sbr.rel (0) target = $region33
    $region32: #{tpu_custom_call.1} parent=1 // pred_region
      %96 = dma.done [#allocation9], 256
    $region33: #{tpu_custom_call.1} parent=1 // pred_fallthru
      _
    %97 = vsyncpa [#allocation3], 1
    %98 = vsyncpa [#allocation6], 1
    %99 = vsyncpa [#allocation4], 1
    %100 = vsyncpa [#allocation9], 1

</llo_original>
